<compile_context>
chip_gen: v7x
topology: tpu7x:2x2x1
jax: 0.10.0
libtpu: 0.0.40
codegen_flags: <defaults>
</compile_context>

<pallas_src>
import functools

import jax
import jax.numpy as jnp
from jax.experimental import pallas as pl
from jax.experimental.pallas import tpu as pltpu


_LANE = 128
_SUBLANE_F32 = 8
# Below this output size a standalone Pallas launch (DMA setup + per-step
# overhead) cannot be amortized -> plain XLA (which also fuses everything).
_PALLAS_MIN_OUT_BYTES = 2 * 1024 * 1024
# Target per-step output bytes: keeps the ~0.35 us fixed per-step overhead
# under ~10% even at v7x's ~3.2 TB/s HBM.
_TARGET_TILE_BYTES = 4 * 1024 * 1024


def _cdiv(a, b):
    return (a + b - 1) // b


def _round_up(x, m):
    return _cdiv(x, m) * m


def _sublane_multiple(dtype):
    # Sub-32-bit dtypes pack along sublanes: 8 for f32, 16 for bf16, 32 for 8-bit.
    return max(_SUBLANE_F32, 32 // jnp.dtype(dtype).itemsize)


@functools.lru_cache(maxsize=1)
def _vmem_capacity_bytes():
    try:
        cap = getattr(pltpu.get_tpu_info(), "vmem_capacity_bytes", None)
        if cap:
            return int(cap)
    except Exception:
        pass
    return 64 * 1024 * 1024  # conservative (v7x per-TC)


def _vmem_limit_bytes():
    # 64 MiB on v5e/v6e (128 MiB physical), 48 MiB on v7x (64 MiB physical).
    return min((_vmem_capacity_bytes() * 3) // 4, 64 * 1024 * 1024)


def _spec_embed_kernel(spec_ref, w_ref, b_ref, o_ref):
    # spec_ref: (TB, 9)    batch tile (f32)
    # w_ref:    (9, N)     VMEM-resident weights (constant index_map)
    # b_ref:    (1, N)     VMEM-resident bias row
    # o_ref:    (TB, N)    output tile
    acc = jnp.dot(spec_ref[...], w_ref[...], preferred_element_type=jnp.float32)
    o_ref[...] = (acc + b_ref[...]).astype(o_ref.dtype)


def _choose_block_b(B, n, out_dtype, block_b):
    out_itemsize = jnp.dtype(out_dtype).itemsize
    sub = _sublane_multiple(out_dtype)
    n_lanes = _round_up(n, _LANE)  # VMEM layout pads the last dim to 128 lanes
    # Double-buffered input (lanes pad 9 -> 128, f32) + output tile, per row.
    row_bytes = 2 * (_LANE * 4 + n_lanes * out_itemsize)
    tile_budget = _vmem_limit_bytes() - (2 * 1024 * 1024)  # headroom: W/b/misc
    tb_vmem = max(sub, (tile_budget // row_bytes) // sub * sub)

    if block_b is not None:
        # Clamp user choice to what fits this generation's VMEM.
        tb = max(sub, min(block_b, tb_vmem) // sub * sub)
        return min(tb, _round_up(B, sub))

    tb_target = max(sub, (_TARGET_TILE_BYTES // (n_lanes * out_itemsize)) // sub * sub)
    tb = min(tb_vmem, tb_target)
    if B <= tb:
        if B >= 2 * sub:
            # Whole batch would fit one tile: still split into two steps so the
            # second TensorCore on v7x gets work (batch axis is "parallel").
            tb = _round_up(_cdiv(B, 2), sub)
        else:
            tb = B  # full-extent block (always a legal block shape)
    return tb


@functools.partial(
    jax.jit, static_argnames=("d_model", "out_dtype", "block_b", "force_pallas")
)
def spec_embedding_9to4(spec, w, b, *, d_model, out_dtype=None,
                        block_b=None, force_pallas=False):
    """Forward pass of SpecEmbedding_9to4.

    spec: (B, 9); w: (9, 4*d_model) packed weights; b: (1, 4*d_model) bias row.
    Returns (B, 4, d_model), matching torch.cat((comp, cond, evap, chiller), 1).
    """
    B = spec.shape[0]
    n = 4 * d_model
    out_dtype = spec.dtype if out_dtype is None else jnp.dtype(out_dtype)
    out_bytes = B * n * jnp.dtype(out_dtype).itemsize

    if (not force_pallas) and out_bytes < _PALLAS_MIN_OUT_BYTES:
        # Tiny problem: a standalone Pallas launch is pure overhead; XLA fuses
        # the gemm + bias + reshape into one pass.
        out_flat = (spec @ w + b).astype(out_dtype)
        return out_flat.reshape(B, 4, d_model)

    tb = _choose_block_b(B, n, out_dtype, block_b)

    out_flat = pl.pallas_call(
        _spec_embed_kernel,
        out_shape=jax.ShapeDtypeStruct((B, n), out_dtype),
        grid_spec=pltpu.PrefetchScalarGridSpec(
            num_scalar_prefetch=0,
            grid=(_cdiv(B, tb),),
            in_specs=[
                pl.BlockSpec((tb, 9), lambda i: (i, 0)),
                pl.BlockSpec((9, n), lambda i: (0, 0)),   # resident weights
                pl.BlockSpec((1, n), lambda i: (0, 0)),   # resident bias row
            ],
            out_specs=pl.BlockSpec((tb, n), lambda i: (i, 0)),
        ),
        compiler_params=pltpu.CompilerParams(
            # Batch axis is embarrassingly parallel -> shard grid steps across
            # the two TensorCores on v7x; harmless on single-TC v5e/v6e.
            dimension_semantics=("parallel",),
            vmem_limit_bytes=_vmem_limit_bytes(),
        ),
    )(spec, w, b)

    # Reshape is metadata-only (no extra HBM pass).
    return out_flat.reshape(B, 4, d_model)


def make_params(d_model, key):
    """Deterministic init mimicking nn.Linear (uniform(-1/sqrt(in), 1/sqrt(in)))."""
    ks = jax.random.split(key, 8)

    def linear(kw, kb, in_f):
        bound = 1.0 / jnp.sqrt(jnp.float32(in_f))
        wgt = jax.random.uniform(kw, (d_model, in_f), jnp.float32, -bound, bound)
        bia = jax.random.uniform(kb, (d_model,), jnp.float32, -bound, bound)
        return wgt, bia

    w_comp, b_comp = linear(ks[0], ks[1], 1)
    w_cond, b_cond = linear(ks[2], ks[3], 2)
    w_evap, b_evap = linear(ks[4], ks[5], 3)
    w_chil, b_chil = linear(ks[6], ks[7], 3)

    # Pack weights into (9, 4, d_model): row = input spec feature.
    W = jnp.zeros((9, 4, d_model), jnp.float32)
    W = W.at[0, 0, :].set(w_comp[:, 0])      # comp    <- spec[:, 0]
    W = W.at[1:3, 1, :].set(w_cond.T)        # cond    <- spec[:, 1:3]
    W = W.at[3, 2, :].set(w_evap[:, 0])      # evap    <- spec[:, 3]
    W = W.at[4, 2, :].set(w_evap[:, 1])      # evap    <- spec[:, 4]
    W = W.at[7, 2, :].set(w_evap[:, 2])      # evap    <- spec[:, 7]
    W = W.at[5, 3, :].set(w_chil[:, 0])      # chiller <- spec[:, 5]
    W = W.at[6, 3, :].set(w_chil[:, 1])      # chiller <- spec[:, 6]
    W = W.at[8, 3, :].set(w_chil[:, 2])      # chiller <- spec[:, 8]

    Bias = jnp.stack([b_comp, b_cond, b_evap, b_chil], axis=0)  # (4, d_model)

    n = 4 * d_model
    w_packed = W.reshape(9, n)
    bias_packed = Bias.reshape(1, n)

    params = dict(comp=(w_comp, b_comp), cond=(w_cond, b_cond),
                  evap=(w_evap, b_evap), chiller=(w_chil, b_chil))
    return w_packed, bias_packed, params


def reference_forward(spec, params):
    """Plain-JAX mirror of the PyTorch forward for verification."""
    def lin(x, wb):
        w, b = wb
        return x @ w.T + b

    comp = lin(spec[:, 0:1], params["comp"])[:, None, :]
    cond = lin(spec[:, 1:3], params["cond"])[:, None, :]
    evap = lin(
        jnp.concatenate([spec[:, 3:5], spec[:, 7:8]], axis=1), params["evap"]
    )[:, None, :]
    chiller = lin(
        jnp.concatenate([spec[:, 5:7], spec[:, 8:9]], axis=1), params["chiller"]
    )[:, None, :]
    return jnp.concatenate([comp, cond, evap, chiller], axis=1)


if __name__ == "__main__":
    d_model = 32

    key = jax.random.PRNGKey(0)
    k_param, k_spec = jax.random.split(key)
    w_packed, bias_packed, params = make_params(d_model, k_param)

    B = 520  # deliberately NOT a multiple of the tile size
    spec = jax.random.normal(k_spec, (B, 9), jnp.float32)
    ref = reference_forward(spec, params)

    # 1) Pallas path, auto tile size (>= 2 grid steps so both v7x TCs get work).
    out = jax.block_until_ready(
        spec_embedding_9to4(spec, w_packed, bias_packed, d_model=d_model,
                            force_pallas=True))
    assert out.shape == (B, 4, d_model), out.shape
    assert jnp.allclose(out, ref, atol=1e-5, rtol=1e-5), float(
        jnp.max(jnp.abs(out - ref)))

    # 2) Pallas path, explicit small block -> multi-step pipeline + partial
    #    last block.
    out2 = jax.block_until_ready(
        spec_embedding_9to4(spec, w_packed, bias_packed, d_model=d_model,
                            block_b=128, force_pallas=True))
    assert jnp.allclose(out2, ref, atol=1e-5, rtol=1e-5)

    # 3) bf16 output (op is write-bound: halves stored bytes); f32 accumulate
    #    inside the kernel, so only the final store is rounded.
    out_bf16 = jax.block_until_ready(
        spec_embedding_9to4(spec, w_packed, bias_packed, d_model=d_model,
                            out_dtype=jnp.bfloat16, force_pallas=True))
    assert out_bf16.dtype == jnp.bfloat16
    assert jnp.allclose(out_bf16.astype(jnp.float32), ref, atol=2e-2, rtol=2e-2)

    # 4) Tiny-batch path: plain-XLA fallback (a Pallas launch would be pure
    #    overhead for a few-KiB output).
    spec_small = spec[:8]
    out_small = jax.block_until_ready(
        spec_embedding_9to4(spec_small, w_packed, bias_packed, d_model=d_model))
    assert out_small.shape == (8, 4, d_model)
    assert jnp.allclose(out_small, reference_forward(spec_small, params),
                        atol=1e-5, rtol=1e-5)

    print("KERNEL_OK")
</pallas_src>

<mosaic_0001>
module attributes {stable_mosaic.version = 11 : i64} {
  func.func @_spec_embed_kernel(%arg0: i32, %arg1: memref<264x9xf32, #tpu.memory_space<vmem>>, %arg2: memref<9x128xf32, #tpu.memory_space<vmem>>, %arg3: memref<1x128xf32, #tpu.memory_space<vmem>>, %arg4: memref<264x128xf32, #tpu.memory_space<vmem>>) attributes {dimension_semantics = [#tpu.dimension_semantics<parallel>], iteration_bounds = array<i64: 2>, scalar_prefetch = 0 : i64, scratch_operands = 0 : i64, tpu.core_type = #tpu.core_type<tc>, window_params = [{transform_indices = @transform_0, window_bounds = array<i64: 264, 9>}, {pipeline_mode = #tpu.pipeline_mode<synchronous>, transform_indices = @transform_1, window_bounds = array<i64: 9, 128>}, {pipeline_mode = #tpu.pipeline_mode<synchronous>, transform_indices = @transform_2, window_bounds = array<i64: 1, 128>}, {transform_indices = @transform_3, window_bounds = array<i64: 264, 128>}]} {
    %c0 = arith.constant 0 : index
    %c0_0 = arith.constant 0 : index
    %0 = vector.load %arg1[%c0, %c0_0] : memref<264x9xf32, #tpu.memory_space<vmem>>, vector<264x9xf32>
    %c0_1 = arith.constant 0 : index
    %c0_2 = arith.constant 0 : index
    %1 = vector.load %arg2[%c0_1, %c0_2] : memref<9x128xf32, #tpu.memory_space<vmem>>, vector<9x128xf32>
    %cst = arith.constant dense<0.000000e+00> : vector<264x128xf32>
    %2 = tpu.matmul %0, %1, %cst {dimension_numbers = #tpu.dot_dimension_numbers<[1], [0], [0], [1], [0, 0, 1, 1], [], []>} : vector<264x9xf32>, vector<9x128xf32>, vector<264x128xf32> -> vector<264x128xf32>
    %c0_3 = arith.constant 0 : index
    %c0_4 = arith.constant 0 : index
    %3 = vector.load %arg3[%c0_3, %c0_4] : memref<1x128xf32, #tpu.memory_space<vmem>>, vector<1x128xf32>
    %4 = vector.broadcast %3 : vector<1x128xf32> to vector<264x128xf32>
    %5 = arith.addf %2, %4 : vector<264x128xf32>
    %c0_5 = arith.constant 0 : index
    %c0_6 = arith.constant 0 : index
    %6 = vector.load %arg4[%c0_5, %c0_6] : memref<264x128xf32, #tpu.memory_space<vmem>>, vector<264x128xf32>
    tpu.vector_store %arg4[%c0_5, %c0_6], %5 {strides = array<i32>} : memref<264x128xf32, #tpu.memory_space<vmem>>, vector<264x128xf32>,
    return
  }
  func.func @transform_0(%arg0: i32) -> (i32, i32) {
    %c0_i32 = arith.constant 0 : i32
    %c0_i32_0 = arith.constant 0 : i32
    return %arg0, %c0_i32 : i32, i32
  }
  func.func @transform_1(%arg0: i32) -> (i32, i32) {
    %c0_i32 = arith.constant 0 : i32
    %c0_i32_0 = arith.constant 0 : i32
    %c0_i32_1 = arith.constant 0 : i32
    return %c0_i32, %c0_i32_0 : i32, i32
  }
  func.func @transform_2(%arg0: i32) -> (i32, i32) {
    %c0_i32 = arith.constant 0 : i32
    %c0_i32_0 = arith.constant 0 : i32
    %c0_i32_1 = arith.constant 0 : i32
    return %c0_i32, %c0_i32_0 : i32, i32
  }
  func.func @transform_3(%arg0: i32) -> (i32, i32) {
    %c0_i32 = arith.constant 0 : i32
    %c0_i32_0 = arith.constant 0 : i32
    return %arg0, %c0_i32 : i32, i32
  }
}

</mosaic_0001>

<llo_original>
// kernel: spec_embedding_9to4.1
$region0: #{spec_embedding_9to4.1}
  #allocation0 [shape = 'u32[]', space=smem, size = 0x4, offset = 0x4, fixed_abs, tag = 'smem constant byte address 0x4 - core index']
  #allocation1 [shape = 'u32[144,128]{1,0:T(1,128)}', space=vmem, size = 0x12000, scoped, tag = 'internal scratch']
  %s0 = inlined_call_operand.vmem [shape: f32[520,9], index: 0, kind: input, shape index: {}]
  %s1 = inlined_call_operand.vmem [shape: f32[9,128], index: 1, kind: input, shape index: {}]
  %s2 = inlined_call_operand.vmem [shape: f32[1,128], index: 2, kind: input, shape index: {}]
  %s3 = inlined_call_operand.vmem [shape: f32[520,128], index: 3, kind: output, shape index: {}]
  %s4 = sld [smem:[#allocation0]]
  $region93: #{spec_embedding_9to4.1} parent=0
    _
  %s6 = ssub.s32 1, %s4
  %s7 = scalar_select 0, %s6, %s4
  $region1: #{spec_embedding_9to4.1} parent=0
    #allocation2 [shape = 'u8[270336]{0}', space=vmem, size = 0x42000, scoped, tag = 'output window, operand 0']
    loop: start=0, step=1, limit=4
    $region2: #{spec_embedding_9to4.1} parent=1 // loop_pre_header
      _
    $region3: #{spec_embedding_9to4.1} parent=1 // loop_header
      %s9 = sphi 0, %s13
      %p10 = scmp.ge.s32.totalorder %s9, 4
      %s19 = sphi 0, %s21
      %s22 = sphi 0, %s19
      %s23 = sphi 0, %s22
      %s39 = sphi 0, %s23
      %s43 = sphi 0, %s43
      %s45 = sphi 0, %s43
      %s46 = sphi 0, %s45
      %s60 = sphi 0, %s46
      %s64 = sphi 0, %s64
      %s66 = sphi 0, %s64
      %s67 = sphi 0, %s66
      %s81 = sphi 0, %s67
      %s87 = sphi 0, %s89
      %s90 = sphi 0, %s87
      %s91 = sphi 0, %s90
      %s107 = sphi 0, %s91
    $region4: #{spec_embedding_9to4.1} parent=1 // loop_header_branch
      %12 = sbr.rel (%p10) target = $region8
    $region5: #{spec_embedding_9to4.1} parent=1 // loop_body
      %s14 = ssub.s32 %s9, 1
      %s15 = ssub.s32 %s9, 2
      %s16 = sadd.s32 %s9, 1
      %s17 = ssub.s32 %s9, %s16
      %p18 = scmp.eq.s32.totalorder %s17, 0
      %s20 = sadd.s32 %s19, 1
      %s21 = scalar_select %p18, %s19, %s20
      %p24 = pneg %p18
      %p25 = scmp.eq.s32.totalorder %s9, 1
      %p26 = por %p24, %p25
      %p27 = scmp.ne.s32.totalorder %s19, %s22
      %p28 = scmp.eq.s32.totalorder %s9, 0
      %p29 = por %p27, %p28
      %p30 = scmp.ne.s32.totalorder %s19, %s22
      %p31 = scmp.eq.s32.totalorder %s14, 1
      %p32 = por %p30, %p31
      %p33 = scmp.ne.s32.totalorder %s22, %s23
      %p34 = scmp.eq.s32.totalorder %s14, 0
      %p35 = por %p33, %p34
      %p36 = scmp.ne.s32.totalorder %s22, %s23
      %p37 = scmp.eq.s32.totalorder %s15, 1
      %p38 = por %p36, %p37
      %p40 = scmp.ne.s32.totalorder %s23, %s39
      %p41 = scmp.eq.s32.totalorder %s15, 0
      %p42 = por %p40, %p41
      %s44 = sadd.s32 %s43, 1
      %p47 = scmp.eq.s32.totalorder %s9, 1
      %p48 = scmp.ne.s32.totalorder %s43, %s45
      %p49 = scmp.eq.s32.totalorder %s9, 0
      %p50 = por %p48, %p49
      %p51 = scmp.ne.s32.totalorder %s43, %s45
      %p52 = scmp.eq.s32.totalorder %s14, 1
      %p53 = por %p51, %p52
      %p54 = scmp.ne.s32.totalorder %s45, %s46
      %p55 = scmp.eq.s32.totalorder %s14, 0
      %p56 = por %p54, %p55
      %p57 = scmp.ne.s32.totalorder %s45, %s46
      %p58 = scmp.eq.s32.totalorder %s15, 1
      %p59 = por %p57, %p58
      %p61 = scmp.ne.s32.totalorder %s46, %s60
      %p62 = scmp.eq.s32.totalorder %s15, 0
      %p63 = por %p61, %p62
      %s65 = sadd.s32 %s64, 1
      %p68 = scmp.eq.s32.totalorder %s9, 1
      %p69 = scmp.ne.s32.totalorder %s64, %s66
      %p70 = scmp.eq.s32.totalorder %s9, 0
      %p71 = por %p69, %p70
      %p72 = scmp.ne.s32.totalorder %s64, %s66
      %p73 = scmp.eq.s32.totalorder %s14, 1
      %p74 = por %p72, %p73
      %p75 = scmp.ne.s32.totalorder %s66, %s67
      %p76 = scmp.eq.s32.totalorder %s14, 0
      %p77 = por %p75, %p76
      %p78 = scmp.ne.s32.totalorder %s66, %s67
      %p79 = scmp.eq.s32.totalorder %s15, 1
      %p80 = por %p78, %p79
      %p82 = scmp.ne.s32.totalorder %s67, %s81
      %p83 = scmp.eq.s32.totalorder %s15, 0
      %p84 = por %p82, %p83
      %s85 = ssub.s32 %s9, %s16
      %p86 = scmp.eq.s32.totalorder %s85, 0
      %s88 = sadd.s32 %s87, 1
      %s89 = scalar_select %p86, %s87, %s88
      %p92 = pneg %p86
      %p93 = scmp.eq.s32.totalorder %s9, 1
      %p94 = por %p92, %p93
      %p95 = scmp.ne.s32.totalorder %s87, %s90
      %p96 = scmp.eq.s32.totalorder %s9, 0
      %p97 = por %p95, %p96
      %p98 = scmp.ne.s32.totalorder %s87, %s90
      %p99 = scmp.eq.s32.totalorder %s14, 1
      %p100 = por %p98, %p99
      %p101 = scmp.ne.s32.totalorder %s90, %s91
      %p102 = scmp.eq.s32.totalorder %s14, 0
      %p103 = por %p101, %p102
      %p104 = scmp.ne.s32.totalorder %s90, %s91
      %p105 = scmp.eq.s32.totalorder %s15, 1
      %p106 = por %p104, %p105
      %p108 = scmp.ne.s32.totalorder %s91, %s107
      %p109 = scmp.eq.s32.totalorder %s15, 0
      %p110 = por %p108, %p109
      %p111 = scmp.le.s32.totalorder 1, %s9
      %p112 = scmp.lt.s32.totalorder %s9, 3
      %p113 = pnand %p111, %p112
      %p114 = pneg %p113
      // Predicated region
      $region9: #{spec_embedding_9to4.1} parent=5 // pred_check
        _
      $region10: #{spec_embedding_9to4.1} parent=5 // pred_check_branch
        %116 = sbr.rel (%p113) target = $region12
      $region11: #{spec_embedding_9to4.1} parent=5 // pred_region
        %s117 = ssub.s32 %s9, 1
        // Predicated region
        $region13: #{spec_embedding_9to4.1} parent=11 // pred_check
          %p118 = pneg %p56
        $region14: #{spec_embedding_9to4.1} parent=11 // pred_check_branch
          %120 = sbr.rel (%p118) target = $region16
        $region15: #{spec_embedding_9to4.1} parent=11 // pred_region
          _
        $region16: #{spec_embedding_9to4.1} parent=11 // pred_fallthru
          _
        // Predicated region
        $region17: #{spec_embedding_9to4.1} parent=11 // pred_check
          %p121 = pneg %p77
        $region18: #{spec_embedding_9to4.1} parent=11 // pred_check_branch
          %123 = sbr.rel (%p121) target = $region20
        $region19: #{spec_embedding_9to4.1} parent=11 // pred_region
          _
        $region20: #{spec_embedding_9to4.1} parent=11 // pred_fallthru
          _
      $region12: #{spec_embedding_9to4.1} parent=5 // pred_fallthru
        _
      %p124 = scmp.lt.s32.totalorder %s9, 2
      // Predicated region
      $region21: #{spec_embedding_9to4.1} parent=5 // pred_check
        %p125 = pneg %p124
      $region22: #{spec_embedding_9to4.1} parent=5 // pred_check_branch
        %127 = sbr.rel (%p125) target = $region24
      $region23: #{spec_embedding_9to4.1} parent=5 // pred_region
        // Predicated region
        $region25: #{spec_embedding_9to4.1} parent=23 // pred_check
          %p128 = pneg %p29
        $region26: #{spec_embedding_9to4.1} parent=23 // pred_check_branch
          %130 = sbr.rel (%p128) target = $region28
        $region27: #{spec_embedding_9to4.1} parent=23 // pred_region
          %s131 = smul.u32 33, %s9
          %s132 = ssub.s32 65, %s131
          %p133 = scmp.lt.s32.totalorder %s132, 33
          %s134 = scalar_select %p133, %s132, 33
          %s135 = smul.u32 128, %s134
          %p136 = scmp.lt.s32.totalorder %s131, 64
          %s137 = scalar_select %p136, %s131, 64
          %s138 = smul.addr %s137, 8
          %s139 = scalar_lea.vmem %s0, %s138
          %s140 = smul.u32 33, %s9
          %s141 = ssub.s32 65, %s140
          %p142 = scmp.lt.s32.totalorder %s141, 33
          %s143 = scalar_select %p142, %s141, 33
          %s144 = smul.u32 128, %s143
        $region28: #{spec_embedding_9to4.1} parent=23 // pred_fallthru
          _
      $region24: #{spec_embedding_9to4.1} parent=5 // pred_fallthru
        _
      %p145 = scmp.le.s32.totalorder 1, %s9
      %p146 = scmp.lt.s32.totalorder %s9, 3
      %p147 = pnand %p145, %p146
      %p148 = pneg %p147
      // Predicated region
      $region29: #{spec_embedding_9to4.1} parent=5 // pred_check
        _
      $region30: #{spec_embedding_9to4.1} parent=5 // pred_check_branch
        %150 = sbr.rel (%p147) target = $region32
      $region31: #{spec_embedding_9to4.1} parent=5 // pred_region
        %s151 = ssub.s32 %s9, 1
        %s152 = smul.u32 33, %s14
        %s153 = ssub.s32 65, %s152
        %p154 = scmp.lt.s32.totalorder %s153, 33
        %s155 = scalar_select %p154, %s153, 33
        %s156 = smul.u32 128, %s155
        %p157 = scmp.lt.s32.totalorder %s152, 64
        %s158 = scalar_select %p157, %s152, 64
        %s159 = smul.addr %s158, 8
        %s160 = scalar_lea.vmem %s0, %s159
        %p161 = pneg %p35
        %p162 = pneg %p32
        %p163 = pneg %p56
        %p164 = pneg %p53
        %p165 = pneg %p77
        %p166 = pneg %p74
        %p167 = pneg %p103
        %p168 = pneg %p100
        %s169 = sand.u32 %s90, 1
        %s170 = sand.u32 %s90, 1
        %s171 = smul.addr %s170, 264
        %s172 = scalar_lea.vmem [#allocation2], %s171
        %s173 = smul.u32 33, %s14
        %s174 = ssub.s32 65, %s173
        %p175 = scmp.lt.s32.totalorder %s174, 33
        %s176 = scalar_select %p175, %s174, 33
        %s177 = smul.u32 128, %s176
        %p178 = scmp.lt.s32.totalorder %s173, 64
        %s179 = scalar_select %p178, %s173, 64
        %s180 = smul.addr %s179, 8
        %s181 = scalar_lea.vmem %s0, %s180
        %s182 = smul.u32 33, %s14
        %s183 = ssub.s32 65, %s182
        %p184 = scmp.lt.s32.totalorder %s183, 33
        %s185 = scalar_select %p184, %s183, 33
        %s186 = smul.u32 128, %s185
        %s187 = smul.u32 33, %s14
        %s188 = ssub.s32 65, %s187
        %p189 = scmp.lt.s32.totalorder %s188, 33
        %s190 = scalar_select %p189, %s188, 33
        %s191 = smul.u32 128, %s190
        %v192 = vld [vmem:[%s181] sm:$0xff]
        %v193 = vld [vmem:[%s181 + $0x8] sm:$0xff]
        %v194 = vld [vmem:[%s181 + $0x10] sm:$0xff]
        %v195 = vld [vmem:[%s181 + $0x18] sm:$0xff]
        %v196 = vld [vmem:[%s181 + $0x20] sm:$0xff]
        %v197 = vld [vmem:[%s181 + $0x28] sm:$0xff]
        %v198 = vld [vmem:[%s181 + $0x30] sm:$0xff]
        %v199 = vld [vmem:[%s181 + $0x38] sm:$0xff]
        %v200 = vld [vmem:[%s181 + $0x40] sm:$0xff]
        %v201 = vld [vmem:[%s181 + $0x48] sm:$0xff]
        %v202 = vld [vmem:[%s181 + $0x50] sm:$0xff]
        %v203 = vld [vmem:[%s181 + $0x58] sm:$0xff]
        %v204 = vld [vmem:[%s181 + $0x60] sm:$0xff]
        %v205 = vld [vmem:[%s181 + $0x68] sm:$0xff]
        %v206 = vld [vmem:[%s181 + $0x70] sm:$0xff]
        %v207 = vld [vmem:[%s181 + $0x78] sm:$0xff]
        %v208 = vld [vmem:[%s181 + $0x80] sm:$0xff]
        %v209 = vld [vmem:[%s181 + $0x88] sm:$0xff]
        %v210 = vld [vmem:[%s181 + $0x90] sm:$0xff]
        %v211 = vld [vmem:[%s181 + $0x98] sm:$0xff]
        %v212 = vld [vmem:[%s181 + $0xa0] sm:$0xff]
        %v213 = vld [vmem:[%s181 + $0xa8] sm:$0xff]
        %v214 = vld [vmem:[%s181 + $0xb0] sm:$0xff]
        %v215 = vld [vmem:[%s181 + $0xb8] sm:$0xff]
        %v216 = vld [vmem:[%s181 + $0xc0] sm:$0xff]
        %v217 = vld [vmem:[%s181 + $0xc8] sm:$0xff]
        %v218 = vld [vmem:[%s181 + $0xd0] sm:$0xff]
        %v219 = vld [vmem:[%s181 + $0xd8] sm:$0xff]
        %v220 = vld [vmem:[%s181 + $0xe0] sm:$0xff]
        %v221 = vld [vmem:[%s181 + $0xe8] sm:$0xff]
        %v222 = vld [vmem:[%s181 + $0xf0] sm:$0xff]
        %v223 = vld [vmem:[%s181 + $0xf8] sm:$0xff]
        %v224 = vld [vmem:[%s181 + $0x100] sm:$0xff]
        %v225 = vld [vmem:[%s1] sm:$0xff]
        %v226 = vld [vmem:[%s1 + $0x8] sm:$0x1]
        %v227 = vld [vmem:[%s2] sm:$0x1]
        %v229 = vlaneseq
        %v230 = vshrl.u32 %v229, 7
        %v231 = vsub.s32 0, %v230
        %v232 = vrot.slane %v227, %v231
        %vm234 = vcmask 72704
        %v236 = vsel %vm234, %v192, 0
        %v239 = vsel %vm234, %v193, 0
        %v242 = vsel %vm234, %v194, 0
        %v245 = vsel %vm234, %v195, 0
        %v248 = vsel %vm234, %v196, 0
        %v251 = vsel %vm234, %v197, 0
        %v254 = vsel %vm234, %v198, 0
        %v257 = vsel %vm234, %v199, 0
        %v260 = vsel %vm234, %v200, 0
        %v263 = vsel %vm234, %v201, 0
        %v266 = vsel %vm234, %v202, 0
        %v269 = vsel %vm234, %v203, 0
        %v272 = vsel %vm234, %v204, 0
        %v275 = vsel %vm234, %v205, 0
        %v278 = vsel %vm234, %v206, 0
        %v281 = vsel %vm234, %v207, 0
        %v284 = vsel %vm234, %v208, 0
        %v287 = vsel %vm234, %v209, 0
        %v290 = vsel %vm234, %v210, 0
        %v293 = vsel %vm234, %v211, 0
        %v296 = vsel %vm234, %v212, 0
        %v299 = vsel %vm234, %v213, 0
        %v302 = vsel %vm234, %v214, 0
        %v305 = vsel %vm234, %v215, 0
        %v308 = vsel %vm234, %v216, 0
        %v311 = vsel %vm234, %v217, 0
        %v314 = vsel %vm234, %v218, 0
        %v317 = vsel %vm234, %v219, 0
        %v320 = vsel %vm234, %v220, 0
        %v323 = vsel %vm234, %v221, 0
        %v326 = vsel %vm234, %v222, 0
        %v329 = vsel %vm234, %v223, 0
        %v332 = vsel %vm234, %v224, 0
        %vm334 = vcmask 1040384
        %v336 = vsel %vm334, %v226, 0
        %338 = vmatprep.subr.mxu0 0.0
        %339 = vmatpush1.msra.mxu0 %v225
        %340 = vmatprep.subr.mxu0 0.0
        %341 = vmatpush1.msra.mxu0 %v336
        %342 = vmatprep.subr.mxu0 0.0
        %343 = vmatpush1.msra.mxu0 0.0
        %344 = vmatprep.subr.mxu0 0.0
        %345 = vmatpush1.msra.mxu0 0.0
        %346 = vmatprep.subr.mxu0 0.0
        %347 = vmatpush1.msra.mxu0 0.0
        %348 = vmatprep.subr.mxu0 0.0
        %349 = vmatpush1.msra.mxu0 0.0
        %350 = vmatprep.subr.mxu0 0.0
        %351 = vmatpush1.msra.mxu0 0.0
        %352 = vmatprep.subr.mxu0 0.0
        %353 = vmatpush1.msra.mxu0 0.0
        %354 = vmatprep.subr.mxu0 0.0
        %355 = vmatpush1.msra.mxu0 0.0
        %356 = vmatprep.subr.mxu0 0.0
        %357 = vmatpush1.msra.mxu0 0.0
        %358 = vmatprep.subr.mxu0 0.0
        %359 = vmatpush1.msra.mxu0 0.0
        %360 = vmatprep.subr.mxu0 0.0
        %361 = vmatpush1.msra.mxu0 0.0
        %362 = vmatprep.subr.mxu0 0.0
        %363 = vmatpush1.msra.mxu0 0.0
        %364 = vmatprep.subr.mxu0 0.0
        %365 = vmatpush1.msra.mxu0 0.0
        %366 = vmatprep.subr.mxu0 0.0
        %367 = vmatpush1.msra.mxu0 0.0
        %368 = vmatprep.subr.mxu0 0.0
        %369 = vmatpush1.msra.mxu0 0.0
        %370 = vmatprep.subr.mxu0 0.0
        %371 = vmatpush1.msra.mxu0 0.0
        %372 = vmatprep.subr.mxu0 0.0
        %373 = vmatpush1.msra.mxu0 0.0
        %374 = vmatprep.subr.mxu0 0.0
        %375 = vmatpush1.msra.mxu0 0.0
        %376 = vmatprep.subr.mxu0 0.0
        %377 = vmatpush1.msra.mxu0 0.0
        %378 = vmatprep.subr.mxu0 0.0
        %379 = vmatpush1.msra.mxu0 0.0
        %380 = vmatprep.subr.mxu0 0.0
        %381 = vmatpush1.msra.mxu0 0.0
        %382 = vmatprep.subr.mxu0 0.0
        %383 = vmatpush1.msra.mxu0 0.0
        %384 = vmatprep.subr.mxu0 0.0
        %385 = vmatpush1.msra.mxu0 0.0
        %386 = vmatprep.subr.mxu0 0.0
        %387 = vmatpush1.msra.mxu0 0.0
        %388 = vmatprep.subr.mxu0 0.0
        %389 = vmatpush1.msra.mxu0 0.0
        %390 = vmatprep.subr.mxu0 0.0
        %391 = vmatpush1.msra.mxu0 0.0
        %392 = vmatprep.subr.mxu0 0.0
        %393 = vmatpush1.msra.mxu0 0.0
        %394 = vmatprep.subr.mxu0 0.0
        %395 = vmatpush1.msra.mxu0 0.0
        %396 = vmatprep.subr.mxu0 0.0
        %397 = vmatpush1.msra.mxu0 0.0
        %398 = vmatprep.subr.mxu0 0.0
        %399 = vmatpush1.msra.mxu0 0.0
        %400 = vmatprep.subr.mxu0 0.0
        %401 = vmatpush1.msra.mxu0 0.0
        %402 = vmatprep.mubr.f32.mxu0 0.0
        %403 = vmatmul.mubr.f32.gmra.mrb[0].mxu0 %v236
        %v404 = vpop.f32.mrb[0].mxu0
        %v405 = vadd.f32 %v232, %v404
        %v406 = vpop.f32.mrb[0].mxu0
        %407 = vmatprep.mubr.f32.mxu0 0.0
        %408 = vmatmul.mubr.f32.gmra.mrb[0].mxu0 %v239
        %v409 = vpop.f32.mrb[0].mxu0
        %v410 = vadd.f32 %v232, %v409
        %v411 = vpop.f32.mrb[0].mxu0
        %412 = vmatprep.mubr.f32.mxu0 0.0
        %413 = vmatmul.mubr.f32.gmra.mrb[0].mxu0 %v242
        %v414 = vpop.f32.mrb[0].mxu0
        %v415 = vadd.f32 %v232, %v414
        %v416 = vpop.f32.mrb[0].mxu0
        %417 = vmatprep.mubr.f32.mxu0 0.0
        %418 = vmatmul.mubr.f32.gmra.mrb[0].mxu0 %v245
        %v419 = vpop.f32.mrb[0].mxu0
        %v420 = vadd.f32 %v232, %v419
        %v421 = vpop.f32.mrb[0].mxu0
        %422 = vmatprep.mubr.f32.mxu0 0.0
        %423 = vmatmul.mubr.f32.gmra.mrb[0].mxu0 %v248
        %v424 = vpop.f32.mrb[0].mxu0
        %v425 = vadd.f32 %v232, %v424
        %v426 = vpop.f32.mrb[0].mxu0
        %427 = vmatprep.mubr.f32.mxu0 0.0
        %428 = vmatmul.mubr.f32.gmra.mrb[0].mxu0 %v251
        %v429 = vpop.f32.mrb[0].mxu0
        %v430 = vadd.f32 %v232, %v429
        %v431 = vpop.f32.mrb[0].mxu0
        %432 = vmatprep.mubr.f32.mxu0 0.0
        %433 = vmatmul.mubr.f32.gmra.mrb[0].mxu0 %v254
        %v434 = vpop.f32.mrb[0].mxu0
        %v435 = vadd.f32 %v232, %v434
        %v436 = vpop.f32.mrb[0].mxu0
        %437 = vmatprep.mubr.f32.mxu0 0.0
        %438 = vmatmul.mubr.f32.gmra.mrb[0].mxu0 %v257
        %v439 = vpop.f32.mrb[0].mxu0
        %v440 = vadd.f32 %v232, %v439
        %v441 = vpop.f32.mrb[0].mxu0
        %442 = vmatprep.mubr.f32.mxu0 0.0
        %443 = vmatmul.mubr.f32.gmra.mrb[0].mxu0 %v260
        %v444 = vpop.f32.mrb[0].mxu0
        %v445 = vadd.f32 %v232, %v444
        %v446 = vpop.f32.mrb[0].mxu0
        %447 = vmatprep.mubr.f32.mxu0 0.0
        %448 = vmatmul.mubr.f32.gmra.mrb[0].mxu0 %v263
        %v449 = vpop.f32.mrb[0].mxu0
        %v450 = vadd.f32 %v232, %v449
        %v451 = vpop.f32.mrb[0].mxu0
        %452 = vmatprep.mubr.f32.mxu0 0.0
        %453 = vmatmul.mubr.f32.gmra.mrb[0].mxu0 %v266
        %v454 = vpop.f32.mrb[0].mxu0
        %v455 = vadd.f32 %v232, %v454
        %v456 = vpop.f32.mrb[0].mxu0
        %457 = vmatprep.mubr.f32.mxu0 0.0
        %458 = vmatmul.mubr.f32.gmra.mrb[0].mxu0 %v269
        %v459 = vpop.f32.mrb[0].mxu0
        %v460 = vadd.f32 %v232, %v459
        %v461 = vpop.f32.mrb[0].mxu0
        %462 = vmatprep.mubr.f32.mxu0 0.0
        %463 = vmatmul.mubr.f32.gmra.mrb[0].mxu0 %v272
        %v464 = vpop.f32.mrb[0].mxu0
        %v465 = vadd.f32 %v232, %v464
        %v466 = vpop.f32.mrb[0].mxu0
        %467 = vmatprep.mubr.f32.mxu0 0.0
        %468 = vmatmul.mubr.f32.gmra.mrb[0].mxu0 %v275
        %v469 = vpop.f32.mrb[0].mxu0
        %v470 = vadd.f32 %v232, %v469
        %v471 = vpop.f32.mrb[0].mxu0
        %472 = vmatprep.mubr.f32.mxu0 0.0
        %473 = vmatmul.mubr.f32.gmra.mrb[0].mxu0 %v278
        %v474 = vpop.f32.mrb[0].mxu0
        %v475 = vadd.f32 %v232, %v474
        %v476 = vpop.f32.mrb[0].mxu0
        %477 = vmatprep.mubr.f32.mxu0 0.0
        %478 = vmatmul.mubr.f32.gmra.mrb[0].mxu0 %v281
        %v479 = vpop.f32.mrb[0].mxu0
        %v480 = vadd.f32 %v232, %v479
        %v481 = vpop.f32.mrb[0].mxu0
        %482 = vmatprep.mubr.f32.mxu0 0.0
        %483 = vmatmul.mubr.f32.gmra.mrb[0].mxu0 %v284
        %v484 = vpop.f32.mrb[0].mxu0
        %v485 = vadd.f32 %v232, %v484
        %v486 = vpop.f32.mrb[0].mxu0
        %487 = vmatprep.mubr.f32.mxu0 0.0
        %488 = vmatmul.mubr.f32.gmra.mrb[0].mxu0 %v287
        %v489 = vpop.f32.mrb[0].mxu0
        %v490 = vadd.f32 %v232, %v489
        %v491 = vpop.f32.mrb[0].mxu0
        %492 = vmatprep.mubr.f32.mxu0 0.0
        %493 = vmatmul.mubr.f32.gmra.mrb[0].mxu0 %v290
        %v494 = vpop.f32.mrb[0].mxu0
        %v495 = vadd.f32 %v232, %v494
        %v496 = vpop.f32.mrb[0].mxu0
        %497 = vmatprep.mubr.f32.mxu0 0.0
        %498 = vmatmul.mubr.f32.gmra.mrb[0].mxu0 %v293
        %v499 = vpop.f32.mrb[0].mxu0
        %v500 = vadd.f32 %v232, %v499
        %v501 = vpop.f32.mrb[0].mxu0
        %502 = vmatprep.mubr.f32.mxu0 0.0
        %503 = vmatmul.mubr.f32.gmra.mrb[0].mxu0 %v296
        %v504 = vpop.f32.mrb[0].mxu0
        %v505 = vadd.f32 %v232, %v504
        %v506 = vpop.f32.mrb[0].mxu0
        %507 = vmatprep.mubr.f32.mxu0 0.0
        %508 = vmatmul.mubr.f32.gmra.mrb[0].mxu0 %v299
        %v509 = vpop.f32.mrb[0].mxu0
        %v510 = vadd.f32 %v232, %v509
        %v511 = vpop.f32.mrb[0].mxu0
        %512 = vmatprep.mubr.f32.mxu0 0.0
        %513 = vmatmul.mubr.f32.gmra.mrb[0].mxu0 %v302
        %v514 = vpop.f32.mrb[0].mxu0
        %v515 = vadd.f32 %v232, %v514
        %v516 = vpop.f32.mrb[0].mxu0
        %517 = vmatprep.mubr.f32.mxu0 0.0
        %518 = vmatmul.mubr.f32.gmra.mrb[0].mxu0 %v305
        %v519 = vpop.f32.mrb[0].mxu0
        %v520 = vadd.f32 %v232, %v519
        %v521 = vpop.f32.mrb[0].mxu0
        %522 = vmatprep.mubr.f32.mxu0 0.0
        %523 = vmatmul.mubr.f32.gmra.mrb[0].mxu0 %v308
        %v524 = vpop.f32.mrb[0].mxu0
        %v525 = vadd.f32 %v232, %v524
        %v526 = vpop.f32.mrb[0].mxu0
        %527 = vmatprep.mubr.f32.mxu0 0.0
        %528 = vmatmul.mubr.f32.gmra.mrb[0].mxu0 %v311
        %v529 = vpop.f32.mrb[0].mxu0
        %v530 = vadd.f32 %v232, %v529
        %v531 = vpop.f32.mrb[0].mxu0
        %532 = vmatprep.mubr.f32.mxu0 0.0
        %533 = vmatmul.mubr.f32.gmra.mrb[0].mxu0 %v314
        %v534 = vpop.f32.mrb[0].mxu0
        %v535 = vadd.f32 %v232, %v534
        %v536 = vpop.f32.mrb[0].mxu0
        %537 = vmatprep.mubr.f32.mxu0 0.0
        %538 = vmatmul.mubr.f32.gmra.mrb[0].mxu0 %v317
        %v539 = vpop.f32.mrb[0].mxu0
        %v540 = vadd.f32 %v232, %v539
        %v541 = vpop.f32.mrb[0].mxu0
        %542 = vmatprep.mubr.f32.mxu0 0.0
        %543 = vmatmul.mubr.f32.gmra.mrb[0].mxu0 %v320
        %v544 = vpop.f32.mrb[0].mxu0
        %v545 = vadd.f32 %v232, %v544
        %v546 = vpop.f32.mrb[0].mxu0
        %547 = vmatprep.mubr.f32.mxu0 0.0
        %548 = vmatmul.mubr.f32.gmra.mrb[0].mxu0 %v323
        %v549 = vpop.f32.mrb[0].mxu0
        %v550 = vadd.f32 %v232, %v549
        %v551 = vpop.f32.mrb[0].mxu0
        %552 = vmatprep.mubr.f32.mxu0 0.0
        %553 = vmatmul.mubr.f32.gmra.mrb[0].mxu0 %v326
        %v554 = vpop.f32.mrb[0].mxu0
        %v555 = vadd.f32 %v232, %v554
        %v556 = vpop.f32.mrb[0].mxu0
        %557 = vmatprep.mubr.f32.mxu0 0.0
        %558 = vmatmul.mubr.f32.gmra.mrb[0].mxu0 %v329
        %v559 = vpop.f32.mrb[0].mxu0
        %v560 = vadd.f32 %v232, %v559
        %v561 = vpop.f32.mrb[0].mxu0
        %562 = vmatprep.mubr.f32.mxu0 0.0
        %563 = vmatmul.mubr.f32.gmra.mrb[0].mxu0 %v332
        %v564 = vpop.f32.mrb[0].mxu0
        %v565 = vadd.f32 %v232, %v564
        %v566 = vpop.f32.mrb[0].mxu0
        %567 = vdwg.mxu0
        %568 = vst [vmem:[%s172] sm:$0xff] %v405
        %569 = vst [vmem:[%s172 + $0x8] sm:$0xff] %v410
        %570 = vst [vmem:[%s172 + $0x10] sm:$0xff] %v415
        %571 = vst [vmem:[%s172 + $0x18] sm:$0xff] %v420
        %572 = vst [vmem:[%s172 + $0x20] sm:$0xff] %v425
        %573 = vst [vmem:[%s172 + $0x28] sm:$0xff] %v430
        %574 = vst [vmem:[%s172 + $0x30] sm:$0xff] %v435
        %575 = vst [vmem:[%s172 + $0x38] sm:$0xff] %v440
        %576 = vst [vmem:[%s172 + $0x40] sm:$0xff] %v445
        %577 = vst [vmem:[%s172 + $0x48] sm:$0xff] %v450
        %578 = vst [vmem:[%s172 + $0x50] sm:$0xff] %v455
        %579 = vst [vmem:[%s172 + $0x58] sm:$0xff] %v460
        %580 = vst [vmem:[%s172 + $0x60] sm:$0xff] %v465
        %581 = vst [vmem:[%s172 + $0x68] sm:$0xff] %v470
        %582 = vst [vmem:[%s172 + $0x70] sm:$0xff] %v475
        %583 = vst [vmem:[%s172 + $0x78] sm:$0xff] %v480
        %584 = vst [vmem:[%s172 + $0x80] sm:$0xff] %v485
        %585 = vst [vmem:[%s172 + $0x88] sm:$0xff] %v490
        %586 = vst [vmem:[%s172 + $0x90] sm:$0xff] %v495
        %587 = vst [vmem:[%s172 + $0x98] sm:$0xff] %v500
        %588 = vst [vmem:[%s172 + $0xa0] sm:$0xff] %v505
        %589 = vst [vmem:[%s172 + $0xa8] sm:$0xff] %v510
        %590 = vst [vmem:[%s172 + $0xb0] sm:$0xff] %v515
        %591 = vst [vmem:[%s172 + $0xb8] sm:$0xff] %v520
        %592 = vst [vmem:[%s172 + $0xc0] sm:$0xff] %v525
        %593 = vst [vmem:[%s172 + $0xc8] sm:$0xff] %v530
        %594 = vst [vmem:[%s172 + $0xd0] sm:$0xff] %v535
        %595 = vst [vmem:[%s172 + $0xd8] sm:$0xff] %v540
        %596 = vst [vmem:[%s172 + $0xe0] sm:$0xff] %v545
        %597 = vst [vmem:[%s172 + $0xe8] sm:$0xff] %v550
        %598 = vst [vmem:[%s172 + $0xf0] sm:$0xff] %v555
        %599 = vst [vmem:[%s172 + $0xf8] sm:$0xff] %v560
        %600 = vst [vmem:[%s172 + $0x100] sm:$0xff] %v565
        %s601 = sand.u32 %s90, 1
        %s602 = sand.u32 %s90, 1
        %s603 = smul.addr %s602, 264
        %s604 = scalar_lea.vmem [#allocation2], %s603
        // Predicated region
        $region33: #{spec_embedding_9to4.1} parent=31 // pred_check
          %p605 = pneg %p100
        $region34: #{spec_embedding_9to4.1} parent=31 // pred_check_branch
          %607 = sbr.rel (%p605) target = $region36
        $region35: #{spec_embedding_9to4.1} parent=31 // pred_region
          %s608 = smul.u32 33, %s14
          %s609 = ssub.s32 65, %s608
          %p610 = scmp.lt.s32.totalorder %s609, 33
          %s611 = scalar_select %p610, %s609, 33
          %s612 = smul.u32 128, %s611
          %p613 = scmp.ne.s32.totalorder 0, %s612
          %s614 = smul.addr %s608, 8
          %s615 = scalar_lea.vmem %s3, %s614
          // Predicated region
          $region37: #{spec_embedding_9to4.1} parent=35 // pred_check
            %p616 = pneg %p613
          $region38: #{spec_embedding_9to4.1} parent=35 // pred_check_branch
            %618 = sbr.rel (%p616) target = $region40
          $region39: #{spec_embedding_9to4.1} parent=35 // pred_region
            // Predicated region
            $region41: #{spec_embedding_9to4.1} parent=39 // pred_check
              _
            $region42: #{spec_embedding_9to4.1} parent=39 // pred_check_branch
              %620 = sbr.rel (0) target = $region44
            $region43: #{spec_embedding_9to4.1} parent=39 // pred_region
              // Predicated region
              $region63: #{spec_embedding_9to4.1} parent=43 // pred_check
                _
              $region64: #{spec_embedding_9to4.1} parent=43 // pred_check_branch
                %734 = sbr.rel (0) target = $region66
              $region65: #{spec_embedding_9to4.1} parent=43 // pred_region
                %s735 = sdiv.u32.pop %s611, 33
                %s736 = srem.u32.pop %s611, 33
                // While loop
                $region67: #{spec_embedding_9to4.1} parent=65 // loop_pre_header
                  _
                $region68: #{spec_embedding_9to4.1} parent=65 // loop_header
                  %s738 = sphi 0, %s740
                  %p739 = scmp.ge.s32.totalorder %s738, %s735
                  %s743 = sphi 0, %s814
                  %s744 = sphi %s604, %s817
                  %s745 = sphi %s615, %s818
                $region69: #{spec_embedding_9to4.1} parent=65 // loop_header_branch
                  %742 = sbr.rel (%p739) target = $region73
                $region70: #{spec_embedding_9to4.1} parent=65 // loop_body
                  %v746 = vld [vmem:[%s744] sm:$0xff]
                  %747 = vst [vmem:[%s745] sm:$0xff] %v746
                  %v748 = vld [vmem:[%s744 + $0x8] sm:$0xff]
                  %749 = vst [vmem:[%s745 + $0x8] sm:$0xff] %v748
                  %v750 = vld [vmem:[%s744 + $0x10] sm:$0xff]
                  %751 = vst [vmem:[%s745 + $0x10] sm:$0xff] %v750
                  %v752 = vld [vmem:[%s744 + $0x18] sm:$0xff]
                  %753 = vst [vmem:[%s745 + $0x18] sm:$0xff] %v752
                  %v754 = vld [vmem:[%s744 + $0x20] sm:$0xff]
                  %755 = vst [vmem:[%s745 + $0x20] sm:$0xff] %v754
                  %v756 = vld [vmem:[%s744 + $0x28] sm:$0xff]
                  %757 = vst [vmem:[%s745 + $0x28] sm:$0xff] %v756
                  %v758 = vld [vmem:[%s744 + $0x30] sm:$0xff]
                  %759 = vst [vmem:[%s745 + $0x30] sm:$0xff] %v758
                  %v760 = vld [vmem:[%s744 + $0x38] sm:$0xff]
                  %761 = vst [vmem:[%s745 + $0x38] sm:$0xff] %v760
                  %v762 = vld [vmem:[%s744 + $0x40] sm:$0xff]
                  %763 = vst [vmem:[%s745 + $0x40] sm:$0xff] %v762
                  %v764 = vld [vmem:[%s744 + $0x48] sm:$0xff]
                  %765 = vst [vmem:[%s745 + $0x48] sm:$0xff] %v764
                  %v766 = vld [vmem:[%s744 + $0x50] sm:$0xff]
                  %767 = vst [vmem:[%s745 + $0x50] sm:$0xff] %v766
                  %v768 = vld [vmem:[%s744 + $0x58] sm:$0xff]
                  %769 = vst [vmem:[%s745 + $0x58] sm:$0xff] %v768
                  %v770 = vld [vmem:[%s744 + $0x60] sm:$0xff]
                  %771 = vst [vmem:[%s745 + $0x60] sm:$0xff] %v770
                  %v772 = vld [vmem:[%s744 + $0x68] sm:$0xff]
                  %773 = vst [vmem:[%s745 + $0x68] sm:$0xff] %v772
                  %v774 = vld [vmem:[%s744 + $0x70] sm:$0xff]
                  %775 = vst [vmem:[%s745 + $0x70] sm:$0xff] %v774
                  %v776 = vld [vmem:[%s744 + $0x78] sm:$0xff]
                  %777 = vst [vmem:[%s745 + $0x78] sm:$0xff] %v776
                  %v778 = vld [vmem:[%s744 + $0x80] sm:$0xff]
                  %779 = vst [vmem:[%s745 + $0x80] sm:$0xff] %v778
                  %v780 = vld [vmem:[%s744 + $0x88] sm:$0xff]
                  %781 = vst [vmem:[%s745 + $0x88] sm:$0xff] %v780
                  %v782 = vld [vmem:[%s744 + $0x90] sm:$0xff]
                  %783 = vst [vmem:[%s745 + $0x90] sm:$0xff] %v782
                  %v784 = vld [vmem:[%s744 + $0x98] sm:$0xff]
                  %785 = vst [vmem:[%s745 + $0x98] sm:$0xff] %v784
                  %v786 = vld [vmem:[%s744 + $0xa0] sm:$0xff]
                  %787 = vst [vmem:[%s745 + $0xa0] sm:$0xff] %v786
                  %v788 = vld [vmem:[%s744 + $0xa8] sm:$0xff]
                  %789 = vst [vmem:[%s745 + $0xa8] sm:$0xff] %v788
                  %v790 = vld [vmem:[%s744 + $0xb0] sm:$0xff]
                  %791 = vst [vmem:[%s745 + $0xb0] sm:$0xff] %v790
                  %v792 = vld [vmem:[%s744 + $0xb8] sm:$0xff]
                  %793 = vst [vmem:[%s745 + $0xb8] sm:$0xff] %v792
                  %v794 = vld [vmem:[%s744 + $0xc0] sm:$0xff]
                  %795 = vst [vmem:[%s745 + $0xc0] sm:$0xff] %v794
                  %v796 = vld [vmem:[%s744 + $0xc8] sm:$0xff]
                  %797 = vst [vmem:[%s745 + $0xc8] sm:$0xff] %v796
                  %v798 = vld [vmem:[%s744 + $0xd0] sm:$0xff]
                  %799 = vst [vmem:[%s745 + $0xd0] sm:$0xff] %v798
                  %v800 = vld [vmem:[%s744 + $0xd8] sm:$0xff]
                  %801 = vst [vmem:[%s745 + $0xd8] sm:$0xff] %v800
                  %v802 = vld [vmem:[%s744 + $0xe0] sm:$0xff]
                  %803 = vst [vmem:[%s745 + $0xe0] sm:$0xff] %v802
                  %v804 = vld [vmem:[%s744 + $0xe8] sm:$0xff]
                  %805 = vst [vmem:[%s745 + $0xe8] sm:$0xff] %v804
                  %v806 = vld [vmem:[%s744 + $0xf0] sm:$0xff]
                  %807 = vst [vmem:[%s745 + $0xf0] sm:$0xff] %v806
                  %v808 = vld [vmem:[%s744 + $0xf8] sm:$0xff]
                  %809 = vst [vmem:[%s745 + $0xf8] sm:$0xff] %v808
                  %v810 = vld [vmem:[%s744 + $0x100] sm:$0xff]
                  %811 = vst [vmem:[%s745 + $0x100] sm:$0xff] %v810
                  %s812 = sadd.s32 1, %s743
                  %p813 = scmp.ge.s32.totalorder %s812, %s735
                  %s814 = scalar_select %p813, 0, %s812
                  %s815 = smul.u32 %s814, 264
                  %s816 = smul.u32 %s814, 264
                  %s817 = scalar_lea.vmem %s604, %s815 [#allocation2]
                  %s818 = scalar_lea.vmem %s615, %s816
                $region71: #{spec_embedding_9to4.1} parent=65 // loop_footer
                  %s740 = sadd.s32 %s738, 1
                $region72: #{spec_embedding_9to4.1} parent=65 // loop_footer_branch
                  %737 = sbr.rel target = $region68
                $region73: #{spec_embedding_9to4.1} parent=65 // loop_exit
                  _
                %s819 = sdiv.u32.pop %s611, 33
                %s820 = srem.u32.pop %s611, 33
                %s821 = smul.u32 %s819, 33
                %s822 = smul.u32 8, %s821
                %s823 = scalar_lea.vmem %s604, %s822 [#allocation2]
                %s824 = smul.u32 8, %s821
                %s825 = scalar_lea.vmem %s615, %s824
                // While loop
                $region74: #{spec_embedding_9to4.1} parent=65 // loop_pre_header
                  _
                $region75: #{spec_embedding_9to4.1} parent=65 // loop_header
                  %s827 = sphi 0, %s829
                  %p828 = scmp.ge.s32.totalorder %s827, %s820
                  %s832 = sphi 0, %s839
                  %s833 = sphi %s823, %s842
                  %s834 = sphi %s825, %s843
                $region76: #{spec_embedding_9to4.1} parent=65 // loop_header_branch
                  %831 = sbr.rel (%p828) target = $region80
                $region77: #{spec_embedding_9to4.1} parent=65 // loop_body
                  %v835 = vld [vmem:[%s833] sm:$0xff]
                  %836 = vst [vmem:[%s834] sm:$0xff] %v835
                  %s837 = sadd.s32 1, %s832
                  %p838 = scmp.ge.s32.totalorder %s837, %s820
                  %s839 = scalar_select %p838, 0, %s837
                  %s840 = smul.u32 %s839, 8
                  %s841 = smul.u32 %s839, 8
                  %s842 = scalar_lea.vmem %s823, %s840 [#allocation2]
                  %s843 = scalar_lea.vmem %s825, %s841
                $region78: #{spec_embedding_9to4.1} parent=65 // loop_footer
                  %s829 = sadd.s32 %s827, 1
                $region79: #{spec_embedding_9to4.1} parent=65 // loop_footer_branch
                  %826 = sbr.rel target = $region75
                $region80: #{spec_embedding_9to4.1} parent=65 // loop_exit
                  _
              $region66: #{spec_embedding_9to4.1} parent=43 // pred_fallthru
                _
              // Predicated region
              $region81: #{spec_embedding_9to4.1} parent=43 // pred_check
                _
              $region82: #{spec_embedding_9to4.1} parent=43 // pred_check_branch
                %845 = sbr.rel target = $region84
              $region83: #{spec_embedding_9to4.1} parent=43 // pred_region
                _
              $region84: #{spec_embedding_9to4.1} parent=43 // pred_fallthru
                _
            $region44: #{spec_embedding_9to4.1} parent=39 // pred_fallthru
              _
            // Predicated region
            $region45: #{spec_embedding_9to4.1} parent=39 // pred_check
              _
            $region46: #{spec_embedding_9to4.1} parent=39 // pred_check_branch
              %622 = sbr.rel target = $region48
            $region47: #{spec_embedding_9to4.1} parent=39 // pred_region
              %s624 = sdiv.u32.pop %s611, 33
              %s625 = srem.u32.pop %s611, 33
              // While loop
              $region49: #{spec_embedding_9to4.1} parent=47 // loop_pre_header
                _
              $region50: #{spec_embedding_9to4.1} parent=47 // loop_header
                %s627 = sphi 0, %s629
                %p628 = scmp.ge.s32.totalorder %s627, %s624
                %s632 = sphi 0, %s703
                %s633 = sphi %s604, %s706
                %s634 = sphi %s615, %s707
              $region51: #{spec_embedding_9to4.1} parent=47 // loop_header_branch
                %631 = sbr.rel (%p628) target = $region55
              $region52: #{spec_embedding_9to4.1} parent=47 // loop_body
                %v635 = vld [vmem:[%s633] sm:$0xff]
                %636 = vst [vmem:[%s634] sm:$0xff] %v635
                %v637 = vld [vmem:[%s633 + $0x8] sm:$0xff]
                %638 = vst [vmem:[%s634 + $0x8] sm:$0xff] %v637
                %v639 = vld [vmem:[%s633 + $0x10] sm:$0xff]
                %640 = vst [vmem:[%s634 + $0x10] sm:$0xff] %v639
                %v641 = vld [vmem:[%s633 + $0x18] sm:$0xff]
                %642 = vst [vmem:[%s634 + $0x18] sm:$0xff] %v641
                %v643 = vld [vmem:[%s633 + $0x20] sm:$0xff]
                %644 = vst [vmem:[%s634 + $0x20] sm:$0xff] %v643
                %v645 = vld [vmem:[%s633 + $0x28] sm:$0xff]
                %646 = vst [vmem:[%s634 + $0x28] sm:$0xff] %v645
                %v647 = vld [vmem:[%s633 + $0x30] sm:$0xff]
                %648 = vst [vmem:[%s634 + $0x30] sm:$0xff] %v647
                %v649 = vld [vmem:[%s633 + $0x38] sm:$0xff]
                %650 = vst [vmem:[%s634 + $0x38] sm:$0xff] %v649
                %v651 = vld [vmem:[%s633 + $0x40] sm:$0xff]
                %652 = vst [vmem:[%s634 + $0x40] sm:$0xff] %v651
                %v653 = vld [vmem:[%s633 + $0x48] sm:$0xff]
                %654 = vst [vmem:[%s634 + $0x48] sm:$0xff] %v653
                %v655 = vld [vmem:[%s633 + $0x50] sm:$0xff]
                %656 = vst [vmem:[%s634 + $0x50] sm:$0xff] %v655
                %v657 = vld [vmem:[%s633 + $0x58] sm:$0xff]
                %658 = vst [vmem:[%s634 + $0x58] sm:$0xff] %v657
                %v659 = vld [vmem:[%s633 + $0x60] sm:$0xff]
                %660 = vst [vmem:[%s634 + $0x60] sm:$0xff] %v659
                %v661 = vld [vmem:[%s633 + $0x68] sm:$0xff]
                %662 = vst [vmem:[%s634 + $0x68] sm:$0xff] %v661
                %v663 = vld [vmem:[%s633 + $0x70] sm:$0xff]
                %664 = vst [vmem:[%s634 + $0x70] sm:$0xff] %v663
                %v665 = vld [vmem:[%s633 + $0x78] sm:$0xff]
                %666 = vst [vmem:[%s634 + $0x78] sm:$0xff] %v665
                %v667 = vld [vmem:[%s633 + $0x80] sm:$0xff]
                %668 = vst [vmem:[%s634 + $0x80] sm:$0xff] %v667
                %v669 = vld [vmem:[%s633 + $0x88] sm:$0xff]
                %670 = vst [vmem:[%s634 + $0x88] sm:$0xff] %v669
                %v671 = vld [vmem:[%s633 + $0x90] sm:$0xff]
                %672 = vst [vmem:[%s634 + $0x90] sm:$0xff] %v671
                %v673 = vld [vmem:[%s633 + $0x98] sm:$0xff]
                %674 = vst [vmem:[%s634 + $0x98] sm:$0xff] %v673
                %v675 = vld [vmem:[%s633 + $0xa0] sm:$0xff]
                %676 = vst [vmem:[%s634 + $0xa0] sm:$0xff] %v675
                %v677 = vld [vmem:[%s633 + $0xa8] sm:$0xff]
                %678 = vst [vmem:[%s634 + $0xa8] sm:$0xff] %v677
                %v679 = vld [vmem:[%s633 + $0xb0] sm:$0xff]
                %680 = vst [vmem:[%s634 + $0xb0] sm:$0xff] %v679
                %v681 = vld [vmem:[%s633 + $0xb8] sm:$0xff]
                %682 = vst [vmem:[%s634 + $0xb8] sm:$0xff] %v681
                %v683 = vld [vmem:[%s633 + $0xc0] sm:$0xff]
                %684 = vst [vmem:[%s634 + $0xc0] sm:$0xff] %v683
                %v685 = vld [vmem:[%s633 + $0xc8] sm:$0xff]
                %686 = vst [vmem:[%s634 + $0xc8] sm:$0xff] %v685
                %v687 = vld [vmem:[%s633 + $0xd0] sm:$0xff]
                %688 = vst [vmem:[%s634 + $0xd0] sm:$0xff] %v687
                %v689 = vld [vmem:[%s633 + $0xd8] sm:$0xff]
                %690 = vst [vmem:[%s634 + $0xd8] sm:$0xff] %v689
                %v691 = vld [vmem:[%s633 + $0xe0] sm:$0xff]
                %692 = vst [vmem:[%s634 + $0xe0] sm:$0xff] %v691
                %v693 = vld [vmem:[%s633 + $0xe8] sm:$0xff]
                %694 = vst [vmem:[%s634 + $0xe8] sm:$0xff] %v693
                %v695 = vld [vmem:[%s633 + $0xf0] sm:$0xff]
                %696 = vst [vmem:[%s634 + $0xf0] sm:$0xff] %v695
                %v697 = vld [vmem:[%s633 + $0xf8] sm:$0xff]
                %698 = vst [vmem:[%s634 + $0xf8] sm:$0xff] %v697
                %v699 = vld [vmem:[%s633 + $0x100] sm:$0xff]
                %700 = vst [vmem:[%s634 + $0x100] sm:$0xff] %v699
                %s701 = sadd.s32 1, %s632
                %p702 = scmp.ge.s32.totalorder %s701, %s624
                %s703 = scalar_select %p702, 0, %s701
                %s704 = smul.u32 %s703, 264
                %s705 = smul.u32 %s703, 264
                %s706 = scalar_lea.vmem %s604, %s704 [#allocation2]
                %s707 = scalar_lea.vmem %s615, %s705
              $region53: #{spec_embedding_9to4.1} parent=47 // loop_footer
                %s629 = sadd.s32 %s627, 1
              $region54: #{spec_embedding_9to4.1} parent=47 // loop_footer_branch
                %626 = sbr.rel target = $region50
              $region55: #{spec_embedding_9to4.1} parent=47 // loop_exit
                _
              %s708 = sdiv.u32.pop %s611, 33
              %s709 = srem.u32.pop %s611, 33
              %s710 = smul.u32 %s708, 33
              %s711 = smul.u32 8, %s710
              %s712 = scalar_lea.vmem %s604, %s711 [#allocation2]
              %s713 = smul.u32 8, %s710
              %s714 = scalar_lea.vmem %s615, %s713
              // While loop
              $region56: #{spec_embedding_9to4.1} parent=47 // loop_pre_header
                _
              $region57: #{spec_embedding_9to4.1} parent=47 // loop_header
                %s716 = sphi 0, %s718
                %p717 = scmp.ge.s32.totalorder %s716, %s709
                %s721 = sphi 0, %s728
                %s722 = sphi %s712, %s731
                %s723 = sphi %s714, %s732
              $region58: #{spec_embedding_9to4.1} parent=47 // loop_header_branch
                %720 = sbr.rel (%p717) target = $region62
              $region59: #{spec_embedding_9to4.1} parent=47 // loop_body
                %v724 = vld [vmem:[%s722] sm:$0xff]
                %725 = vst [vmem:[%s723] sm:$0xff] %v724
                %s726 = sadd.s32 1, %s721
                %p727 = scmp.ge.s32.totalorder %s726, %s709
                %s728 = scalar_select %p727, 0, %s726
                %s729 = smul.u32 %s728, 8
                %s730 = smul.u32 %s728, 8
                %s731 = scalar_lea.vmem %s712, %s729 [#allocation2]
                %s732 = scalar_lea.vmem %s714, %s730
              $region60: #{spec_embedding_9to4.1} parent=47 // loop_footer
                %s718 = sadd.s32 %s716, 1
              $region61: #{spec_embedding_9to4.1} parent=47 // loop_footer_branch
                %715 = sbr.rel target = $region57
              $region62: #{spec_embedding_9to4.1} parent=47 // loop_exit
                _
            $region48: #{spec_embedding_9to4.1} parent=39 // pred_fallthru
              _
          $region40: #{spec_embedding_9to4.1} parent=35 // pred_fallthru
            _
          %846 = vnop
        $region36: #{spec_embedding_9to4.1} parent=31 // pred_fallthru
          _
      $region32: #{spec_embedding_9to4.1} parent=5 // pred_fallthru
        _
      %p847 = scmp.le.s32.totalorder 2, %s9
      // Predicated region
      $region85: #{spec_embedding_9to4.1} parent=5 // pred_check
        %p848 = pneg %p847
      $region86: #{spec_embedding_9to4.1} parent=5 // pred_check_branch
        %850 = sbr.rel (%p848) target = $region88
      $region87: #{spec_embedding_9to4.1} parent=5 // pred_region
        %s851 = ssub.s32 %s9, 2
        // Predicated region
        $region89: #{spec_embedding_9to4.1} parent=87 // pred_check
          %p852 = pneg %p106
        $region90: #{spec_embedding_9to4.1} parent=87 // pred_check_branch
          %854 = sbr.rel (%p852) target = $region92
        $region91: #{spec_embedding_9to4.1} parent=87 // pred_region
          %s855 = sand.u32 %s91, 1
          %s856 = sand.u32 %s91, 1
          %s857 = smul.addr %s856, 264
          %s858 = scalar_lea.vmem [#allocation2], %s857
        $region92: #{spec_embedding_9to4.1} parent=87 // pred_fallthru
          _
      $region88: #{spec_embedding_9to4.1} parent=5 // pred_fallthru
        _
    $region6: #{spec_embedding_9to4.1} parent=1 // loop_footer
      %s13 = sadd.s32 1, %s9
    $region7: #{spec_embedding_9to4.1} parent=1 // loop_footer_branch
      %8 = sbr.rel target = $region3
    $region8: #{spec_embedding_9to4.1} parent=1 // loop_exit
      _

</llo_original>
